<compile_context>
chip_gen: v7x
topology: tpu7x:2x2x1
jax: 0.10.0
libtpu: 0.0.40
codegen_flags: <defaults>
</compile_context>

<pallas_src>
import functools

import jax
import jax.numpy as jnp
from jax.experimental import pallas as pl
from jax.experimental.pallas import tpu as pltpu


def _round_up(x, m):
    return (x + m - 1) // m * m


def _ve_kernel(patches_ref, wc_ref, bc_ref, wcls_ref, bcls_ref,
               pf_ref, avg_ref, lab_ref, psum_ref, *, inv_s):
    # patches_ref: (Bblk, St, Kp) bf16
    # wc_ref:      (Kp, Cp) bf16     bc_ref:   (1, Cp) f32
    # wcls_ref:    (Cp, Lp) bf16     bcls_ref: (1, Lp) f32
    # pf_ref: (Bblk, St, Cp)   avg_ref: (Bblk, Cp)   lab_ref: (Bblk, Lp)
    # psum_ref: (Bblk, Kp) f32 running spatial sum of the patches.
    s = pl.program_id(1)
    ns = pl.num_programs(1)
    Bblk, St, Kp = patches_ref.shape
    Cp = wc_ref.shape[1]

    patches = patches_ref[...]                                      # bf16

    # "backbone" patch-embedding conv tile: one MXU matmul, f32 accumulation.
    pf = jnp.dot(patches.reshape(Bblk * St, Kp), wc_ref[...],
                 preferred_element_type=jnp.float32) + bc_ref[...]  # (Bblk*St, Cp)
    pf_ref[...] = pf.reshape(Bblk, St, Cp).astype(pf_ref.dtype)

    # Running spatial sum of the patches (not of pf): keeps avg/labels
    # independent of the pf tile's live range and of the S tiling.
    @pl.when(s == 0)
    def _():
        psum_ref[...] = jnp.zeros_like(psum_ref)

    psum_ref[...] += jnp.sum(patches.astype(jnp.float32), axis=1)

    # Epilogue on the last spatial step: global average pool + classifier.
    # mean_s(pf) == (mean_s(patches)) @ W + b exactly (linearity); padded
    # spatial rows are zero and inv_s uses the true S.
    @pl.when(s == ns - 1)
    def _():
        mean_p = (psum_ref[...] * inv_s).astype(wc_ref.dtype)       # (Bblk, Kp) bf16
        avg = jnp.dot(mean_p, wc_ref[...],
                      preferred_element_type=jnp.float32) + bc_ref[...]
        avg_ref[...] = avg.astype(avg_ref.dtype)
        lab = jnp.dot(avg.astype(wcls_ref.dtype), wcls_ref[...],
                      preferred_element_type=jnp.float32) + bcls_ref[...]
        lab_ref[...] = lab.astype(lab_ref.dtype)


def visual_extractor_forward(images, conv_w, conv_b, cls_w, cls_b, *,
                             patch=4, block_b=32, s_tile=None,
                             out_dtype=jnp.bfloat16, nchw_patch_feats=False):
    """images: (B, C_in, H, W) float32 (PyTorch NCHW convention).

    Returns (patch_feats, avg_feats, labels); patch_feats is (B, S, C_feat)
    (set nchw_patch_feats=True for the PyTorch (B, C_feat, Hf, Wf) layout at
    the cost of an extra HBM round trip of the largest tensor).
    """
    B, C_in, H, W = images.shape
    P = patch
    Hf, Wf = H // P, W // P
    S = Hf * Wf
    K = P * P * C_in
    C_feat = conv_w.shape[1]
    L = cls_w.shape[1]

    # Lane-dense / MXU-aligned padded sizes (no-ops when already multiples).
    Kp = _round_up(K, 128)
    Cp = _round_up(C_feat, 128)
    Lp = _round_up(L, 128)

    # Batch block: sublane-aligned, but keep >= 2 grid steps when B allows so
    # both v7x TensorCores get work via the "parallel" batch axis.
    Bblk = max(8, min(_round_up(block_b, 8), _round_up(-(-B // 2), 8)))
    Bp = _round_up(B, Bblk)

    # Spatial tile: multiple of 8 so in-kernel reshapes stay tile aligned;
    # default sized so Bblk*s_tile >= 512 MXU rows when S is big enough.
    Sp8 = _round_up(S, 8)
    if s_tile is None:
        s_tile = min(Sp8, max(8, _round_up(512 // Bblk, 8)))
    else:
        s_tile = _round_up(s_tile, 8)
    s_tile = min(s_tile, Sp8)
    Sp = _round_up(S, s_tile)

    # TODO(synk): wrapper-side im2col (and the NCHW->NHWC transpose) costs one
    # input-sized HBM round trip; feed NHWC / patchify in-kernel to remove it.
    x = jnp.transpose(images, (0, 2, 3, 1))                          # NHWC
    x = x.reshape(B, Hf, P, Wf, P, C_in)
    x = jnp.transpose(x, (0, 1, 3, 2, 4, 5)).reshape(B, S, K)        # (B, S, K)
    patches = jnp.pad(
        x, ((0, Bp - B), (0, Sp - S), (0, Kp - K))).astype(jnp.bfloat16)

    wc = jnp.pad(conv_w, ((0, Kp - K), (0, Cp - C_feat))).astype(jnp.bfloat16)
    bc = jnp.pad(conv_b, (0, Cp - C_feat)).reshape(1, Cp).astype(jnp.float32)
    wcls = jnp.pad(cls_w, ((0, Cp - C_feat), (0, Lp - L))).astype(jnp.bfloat16)
    bcls = jnp.pad(cls_b, (0, Lp - L)).reshape(1, Lp).astype(jnp.float32)

    grid = (Bp // Bblk, Sp // s_tile)
    kernel = functools.partial(_ve_kernel, inv_s=1.0 / float(S))

    pf_pad, avg_pad, lab_pad = pl.pallas_call(
        kernel,
        out_shape=(
            jax.ShapeDtypeStruct((Bp, Sp, Cp), out_dtype),
            jax.ShapeDtypeStruct((Bp, Cp), jnp.float32),
            jax.ShapeDtypeStruct((Bp, Lp), jnp.float32),
        ),
        grid_spec=pltpu.PrefetchScalarGridSpec(
            num_scalar_prefetch=0,
            grid=grid,
            in_specs=[
                pl.BlockSpec((Bblk, s_tile, Kp), lambda b, s: (b, s, 0)),
                pl.BlockSpec((Kp, Cp), lambda b, s: (0, 0)),
                pl.BlockSpec((1, Cp), lambda b, s: (0, 0)),
                pl.BlockSpec((Cp, Lp), lambda b, s: (0, 0)),
                pl.BlockSpec((1, Lp), lambda b, s: (0, 0)),
            ],
            out_specs=[
                pl.BlockSpec((Bblk, s_tile, Cp), lambda b, s: (b, s, 0)),
                pl.BlockSpec((Bblk, Cp), lambda b, s: (b, 0)),
                pl.BlockSpec((Bblk, Lp), lambda b, s: (b, 0)),
            ],
            scratch_shapes=[pltpu.VMEM((Bblk, Kp), jnp.float32)],
        ),
        compiler_params=pltpu.CompilerParams(
            dimension_semantics=("parallel", "arbitrary"),
            vmem_limit_bytes=32 * 1024 * 1024,
        ),
    )(patches, wc, bc, wcls, bcls)

    patch_feats = pf_pad[:B, :S, :C_feat]                            # (B, S, C_feat)
    if nchw_patch_feats:
        patch_feats = jnp.transpose(
            patch_feats.reshape(B, Hf, Wf, C_feat), (0, 3, 1, 2))
    avg_feats = avg_pad[:B, :C_feat]
    labels = lab_pad[:B, :L]
    return patch_feats, avg_feats, labels


if __name__ == "__main__":
    key = jax.random.PRNGKey(0)
    k_img, k_wc, k_bc, k_wcls, k_bcls = jax.random.split(key, 5)

    # Small demo shapes; B=16 with adaptive Bblk=8 gives a 2-step parallel
    # batch grid (both v7x TensorCores); s_tile=8 exercises the S-reduction.
    B, C_in, H, W = 16, 3, 16, 16
    P = 4                      # patch-conv kernel/stride (backbone stand-in)
    C_feat = 64                # stands in for resnet50's 2048 (padded to 128)
    num_labels = 14            # padded to 128 inside the kernel
    K = P * P * C_in           # 48 (padded to 128)

    images = jax.random.normal(k_img, (B, C_in, H, W), dtype=jnp.float32)
    conv_w = jax.random.normal(k_wc, (K, C_feat), dtype=jnp.float32) * 0.05
    conv_b = jax.random.normal(k_bc, (C_feat,), dtype=jnp.float32) * 0.01
    cls_w = jax.random.normal(k_wcls, (C_feat, num_labels), dtype=jnp.float32) * 0.05
    cls_b = jax.random.normal(k_bcls, (num_labels,), dtype=jnp.float32) * 0.01

    patch_feats, avg_feats, labels = jax.block_until_ready(
        visual_extractor_forward(images, conv_w, conv_b, cls_w, cls_b,
                                 patch=P, block_b=32, s_tile=8))

    # Pure-JAX reference with the same bf16 operand rounding.
    Hf, Wf = H // P, W // P
    S = Hf * Wf
    x = jnp.transpose(images, (0, 2, 3, 1)).reshape(B, Hf, P, Wf, P, C_in)
    x = jnp.transpose(x, (0, 1, 3, 2, 4, 5)).reshape(B, S, K)
    xb = x.astype(jnp.bfloat16).astype(jnp.float32)
    wcb = conv_w.astype(jnp.bfloat16).astype(jnp.float32)
    wclsb = cls_w.astype(jnp.bfloat16).astype(jnp.float32)
    pf_ref = xb @ wcb + conv_b                                   # (B, S, C_feat)
    avg_ref = pf_ref.mean(axis=1)                                # (B, C_feat)
    lab_ref = avg_ref.astype(jnp.bfloat16).astype(jnp.float32) @ wclsb + cls_b

    assert patch_feats.shape == (B, S, C_feat)
    assert patch_feats.dtype == jnp.bfloat16
    assert avg_feats.shape == (B, C_feat)
    assert labels.shape == (B, num_labels)
    assert jnp.allclose(patch_feats.astype(jnp.float32), pf_ref, atol=2e-2, rtol=2e-2)
    assert jnp.allclose(avg_feats, avg_ref, atol=2e-2, rtol=2e-2)
    assert jnp.allclose(labels, lab_ref, atol=2e-2, rtol=2e-2)

    # Optional NCHW layout still matches the PyTorch convention.
    pf_nchw, _, _ = jax.block_until_ready(
        visual_extractor_forward(images, conv_w, conv_b, cls_w, cls_b,
                                 patch=P, block_b=32, s_tile=8,
                                 nchw_patch_feats=True))
    assert pf_nchw.shape == (B, C_feat, Hf, Wf)

    print("KERNEL_OK")
</pallas_src>

<mosaic_0001>
module attributes {stable_mosaic.version = 11 : i64} {
  func.func @_ve_kernel(%arg0: i32, %arg1: i32, %arg2: memref<8x8x128xbf16, #tpu.memory_space<vmem>>, %arg3: memref<128x128xbf16, #tpu.memory_space<vmem>>, %arg4: memref<1x128xf32, #tpu.memory_space<vmem>>, %arg5: memref<128x128xbf16, #tpu.memory_space<vmem>>, %arg6: memref<1x128xf32, #tpu.memory_space<vmem>>, %arg7: memref<8x8x128xbf16, #tpu.memory_space<vmem>>, %arg8: memref<8x128xf32, #tpu.memory_space<vmem>>, %arg9: memref<8x128xf32, #tpu.memory_space<vmem>>, %arg10: memref<8x128xf32, #tpu.memory_space<vmem>>) attributes {dimension_semantics = [#tpu.dimension_semantics<parallel>, #tpu.dimension_semantics<arbitrary>], iteration_bounds = array<i64: 2, 2>, scalar_prefetch = 0 : i64, scratch_operands = 1 : i64, tpu.core_type = #tpu.core_type<tc>, window_params = [{transform_indices = @transform_0, window_bounds = array<i64: 8, 8, 128>}, {pipeline_mode = #tpu.pipeline_mode<synchronous>, transform_indices = @transform_1, window_bounds = array<i64: 128, 128>}, {pipeline_mode = #tpu.pipeline_mode<synchronous>, transform_indices = @transform_2, window_bounds = array<i64: 1, 128>}, {pipeline_mode = #tpu.pipeline_mode<synchronous>, transform_indices = @transform_3, window_bounds = array<i64: 128, 128>}, {pipeline_mode = #tpu.pipeline_mode<synchronous>, transform_indices = @transform_4, window_bounds = array<i64: 1, 128>}, {transform_indices = @transform_5, window_bounds = array<i64: 8, 8, 128>}, {transform_indices = @transform_6, window_bounds = array<i64: 8, 128>}, {transform_indices = @transform_7, window_bounds = array<i64: 8, 128>}]} {
    %c0 = arith.constant 0 : index
    %c0_0 = arith.constant 0 : index
    %c0_1 = arith.constant 0 : index
    %0 = vector.load %arg2[%c0, %c0_0, %c0_1] : memref<8x8x128xbf16, #tpu.memory_space<vmem>>, vector<8x8x128xbf16>
    %1 = vector.shape_cast %0 : vector<8x8x128xbf16> to vector<64x128xbf16>
    %c0_2 = arith.constant 0 : index
    %c0_3 = arith.constant 0 : index
    %2 = vector.load %arg3[%c0_2, %c0_3] : memref<128x128xbf16, #tpu.memory_space<vmem>>, vector<128x128xbf16>
    %cst = arith.constant dense<0.000000e+00> : vector<64x128xf32>
    %3 = tpu.matmul %1, %2, %cst {dimension_numbers = #tpu.dot_dimension_numbers<[1], [0], [0], [1], [0, 0, 1, 1], [], []>} : vector<64x128xbf16>, vector<128x128xbf16>, vector<64x128xf32> -> vector<64x128xf32>
    %c0_4 = arith.constant 0 : index
    %c0_5 = arith.constant 0 : index
    %4 = vector.load %arg4[%c0_4, %c0_5] : memref<1x128xf32, #tpu.memory_space<vmem>>, vector<1x128xf32>
    %5 = vector.broadcast %4 : vector<1x128xf32> to vector<64x128xf32>
    %6 = arith.addf %3, %5 : vector<64x128xf32>
    %7 = vector.shape_cast %6 : vector<64x128xf32> to vector<8x8x128xf32>
    %8 = arith.truncf %7 : vector<8x8x128xf32> to vector<8x8x128xbf16>
    %c0_6 = arith.constant 0 : index
    %c0_7 = arith.constant 0 : index
    %c0_8 = arith.constant 0 : index
    %9 = vector.load %arg7[%c0_6, %c0_7, %c0_8] : memref<8x8x128xbf16, #tpu.memory_space<vmem>>, vector<8x8x128xbf16>
    tpu.vector_store %arg7[%c0_6, %c0_7, %c0_8], %8 {strides = array<i32>} : memref<8x8x128xbf16, #tpu.memory_space<vmem>>, vector<8x8x128xbf16>,
    %c0_i32 = arith.constant 0 : i32
    %10 = arith.cmpi eq, %arg1, %c0_i32 : i32
    %11 = arith.extui %10 : i1 to i32
    %c0_i32_9 = arith.constant 0 : i32
    %12 = arith.cmpi ne, %11, %c0_i32_9 : i32
    scf.if %12 {
      %cst_16 = arith.constant 0.000000e+00 : f32
      %21 = vector.broadcast %cst_16 : f32 to vector<8x128xf32>
      %c0_17 = arith.constant 0 : index
      %c0_18 = arith.constant 0 : index
      %22 = vector.load %arg10[%c0_17, %c0_18] : memref<8x128xf32, #tpu.memory_space<vmem>>, vector<8x128xf32>
      tpu.vector_store %arg10[%c0_17, %c0_18], %21 {strides = array<i32>} : memref<8x128xf32, #tpu.memory_space<vmem>>, vector<8x128xf32>,
    } else {
    }
    %c0_10 = arith.constant 0 : index
    %c0_11 = arith.constant 0 : index
    %13 = vector.load %arg10[%c0_10, %c0_11] : memref<8x128xf32, #tpu.memory_space<vmem>>, vector<8x128xf32>
    %14 = arith.extf %0 : vector<8x8x128xbf16> to vector<8x8x128xf32>
    %cst_12 = arith.constant dense<0.000000e+00> : vector<8x128xf32>
    %15 = vector.multi_reduction <add>, %14, %cst_12 [1] : vector<8x8x128xf32> to vector<8x128xf32>
    %16 = arith.addf %13, %15 : vector<8x128xf32>
    %c0_13 = arith.constant 0 : index
    %c0_14 = arith.constant 0 : index
    %17 = vector.load %arg10[%c0_13, %c0_14] : memref<8x128xf32, #tpu.memory_space<vmem>>, vector<8x128xf32>
    tpu.vector_store %arg10[%c0_13, %c0_14], %16 {strides = array<i32>} : memref<8x128xf32, #tpu.memory_space<vmem>>, vector<8x128xf32>,
    %c1_i32 = arith.constant 1 : i32
    %18 = arith.cmpi eq, %arg1, %c1_i32 : i32
    %19 = arith.extui %18 : i1 to i32
    %c0_i32_15 = arith.constant 0 : i32
    %20 = arith.cmpi ne, %19, %c0_i32_15 : i32
    scf.if %20 {
      %c0_16 = arith.constant 0 : index
      %c0_17 = arith.constant 0 : index
      %21 = vector.load %arg10[%c0_16, %c0_17] : memref<8x128xf32, #tpu.memory_space<vmem>>, vector<8x128xf32>
      %cst_18 = arith.constant 6.250000e-02 : f32
      %22 = vector.broadcast %cst_18 : f32 to vector<8x128xf32>
      %23 = arith.mulf %21, %22 : vector<8x128xf32>
      %24 = arith.truncf %23 : vector<8x128xf32> to vector<8x128xbf16>
      %c0_19 = arith.constant 0 : index
      %c0_20 = arith.constant 0 : index
      %25 = vector.load %arg3[%c0_19, %c0_20] : memref<128x128xbf16, #tpu.memory_space<vmem>>, vector<128x128xbf16>
      %cst_21 = arith.constant dense<0.000000e+00> : vector<8x128xf32>
      %26 = tpu.matmul %24, %25, %cst_21 {dimension_numbers = #tpu.dot_dimension_numbers<[1], [0], [0], [1], [0, 0, 1, 1], [], []>} : vector<8x128xbf16>, vector<128x128xbf16>, vector<8x128xf32> -> vector<8x128xf32>
      %c0_22 = arith.constant 0 : index
      %c0_23 = arith.constant 0 : index
      %27 = vector.load %arg4[%c0_22, %c0_23] : memref<1x128xf32, #tpu.memory_space<vmem>>, vector<1x128xf32>
      %28 = vector.broadcast %27 : vector<1x128xf32> to vector<8x128xf32>
      %29 = arith.addf %26, %28 : vector<8x128xf32>
      %c0_24 = arith.constant 0 : index
      %c0_25 = arith.constant 0 : index
      %30 = vector.load %arg8[%c0_24, %c0_25] : memref<8x128xf32, #tpu.memory_space<vmem>>, vector<8x128xf32>
      tpu.vector_store %arg8[%c0_24, %c0_25], %29 {strides = array<i32>} : memref<8x128xf32, #tpu.memory_space<vmem>>, vector<8x128xf32>,
      %31 = arith.truncf %29 : vector<8x128xf32> to vector<8x128xbf16>
      %c0_26 = arith.constant 0 : index
      %c0_27 = arith.constant 0 : index
      %32 = vector.load %arg5[%c0_26, %c0_27] : memref<128x128xbf16, #tpu.memory_space<vmem>>, vector<128x128xbf16>
      %cst_28 = arith.constant dense<0.000000e+00> : vector<8x128xf32>
      %33 = tpu.matmul %31, %32, %cst_28 {dimension_numbers = #tpu.dot_dimension_numbers<[1], [0], [0], [1], [0, 0, 1, 1], [], []>} : vector<8x128xbf16>, vector<128x128xbf16>, vector<8x128xf32> -> vector<8x128xf32>
      %c0_29 = arith.constant 0 : index
      %c0_30 = arith.constant 0 : index
      %34 = vector.load %arg6[%c0_29, %c0_30] : memref<1x128xf32, #tpu.memory_space<vmem>>, vector<1x128xf32>
      %35 = vector.broadcast %34 : vector<1x128xf32> to vector<8x128xf32>
      %36 = arith.addf %33, %35 : vector<8x128xf32>
      %c0_31 = arith.constant 0 : index
      %c0_32 = arith.constant 0 : index
      %37 = vector.load %arg9[%c0_31, %c0_32] : memref<8x128xf32, #tpu.memory_space<vmem>>, vector<8x128xf32>
      tpu.vector_store %arg9[%c0_31, %c0_32], %36 {strides = array<i32>} : memref<8x128xf32, #tpu.memory_space<vmem>>, vector<8x128xf32>,
    } else {
    }
    return
  }
  func.func @transform_0(%arg0: i32, %arg1: i32) -> (i32, i32, i32) {
    %c0_i32 = arith.constant 0 : i32
    %c0_i32_0 = arith.constant 0 : i32
    return %arg0, %arg1, %c0_i32 : i32, i32, i32
  }
  func.func @transform_1(%arg0: i32, %arg1: i32) -> (i32, i32) {
    %c0_i32 = arith.constant 0 : i32
    %c0_i32_0 = arith.constant 0 : i32
    %c0_i32_1 = arith.constant 0 : i32
    return %c0_i32, %c0_i32_0 : i32, i32
  }
  func.func @transform_2(%arg0: i32, %arg1: i32) -> (i32, i32) {
    %c0_i32 = arith.constant 0 : i32
    %c0_i32_0 = arith.constant 0 : i32
    %c0_i32_1 = arith.constant 0 : i32
    return %c0_i32, %c0_i32_0 : i32, i32
  }
  func.func @transform_3(%arg0: i32, %arg1: i32) -> (i32, i32) {
    %c0_i32 = arith.constant 0 : i32
    %c0_i32_0 = arith.constant 0 : i32
    %c0_i32_1 = arith.constant 0 : i32
    return %c0_i32, %c0_i32_0 : i32, i32
  }
  func.func @transform_4(%arg0: i32, %arg1: i32) -> (i32, i32) {
    %c0_i32 = arith.constant 0 : i32
    %c0_i32_0 = arith.constant 0 : i32
    %c0_i32_1 = arith.constant 0 : i32
    return %c0_i32, %c0_i32_0 : i32, i32
  }
  func.func @transform_5(%arg0: i32, %arg1: i32) -> (i32, i32, i32) {
    %c0_i32 = arith.constant 0 : i32
    %c0_i32_0 = arith.constant 0 : i32
    return %arg0, %arg1, %c0_i32 : i32, i32, i32
  }
  func.func @transform_6(%arg0: i32, %arg1: i32) -> (i32, i32) {
    %c0_i32 = arith.constant 0 : i32
    %c0_i32_0 = arith.constant 0 : i32
    return %arg0, %c0_i32 : i32, i32
  }
  func.func @transform_7(%arg0: i32, %arg1: i32) -> (i32, i32) {
    %c0_i32 = arith.constant 0 : i32
    %c0_i32_0 = arith.constant 0 : i32
    return %arg0, %c0_i32 : i32, i32
  }
}

</mosaic_0001>

<llo_original>
// kernel: tpu_custom_call.1
$region0: #{tpu_custom_call.1}
  #allocation0 [shape = 'u32[]', space=smem, size = 0x4, offset = 0x4, fixed_abs, tag = 'smem constant byte address 0x4 - core index']
  #allocation1 [shape = 'u32[144,128]{1,0:T(1,128)}', space=vmem, size = 0x12000, scoped, tag = 'internal scratch']
  #allocation2 [shape = 'f32[8,128]{1,0:T(8,128)}', space=vmem, size = 0x1000, scoped, tag = 'scratch operand']
  %s0 = inlined_call_operand.hbm [shape: bf16[16,16,128], index: 0, kind: input, shape index: {}]
  %s1 = inlined_call_operand.hbm [shape: bf16[128,128], index: 1, kind: input, shape index: {}]
  %s2 = inlined_call_operand.vmem [shape: f32[1,128], index: 2, kind: input, shape index: {}]
  %s3 = inlined_call_operand.hbm [shape: bf16[128,128], index: 3, kind: input, shape index: {}]
  %s4 = inlined_call_operand.vmem [shape: f32[1,128], index: 4, kind: input, shape index: {}]
  %s5 = inlined_call_operand.hbm [shape: bf16[16,16,128], index: 5, kind: output, shape index: {0}]
  %s6 = inlined_call_operand.hbm [shape: f32[16,128], index: 6, kind: output, shape index: {1}]
  %s7 = inlined_call_operand.hbm [shape: f32[16,128], index: 7, kind: output, shape index: {2}]
  %8 = xla_tuple %s5, %s6, %s7
  %s9 = sld [smem:[#allocation0]]
  $region89: #{tpu_custom_call.1} parent=0
    _
  %s11 = ssub.s32 1, %s9
  %s12 = scalar_select 0, %s11, %s9
  $region1: #{tpu_custom_call.1} parent=0
    #allocation3 [shape = 'u8[32768]{0}', space=vmem, size = 0x8000, scoped, tag = 'input window, operand 0']
    #allocation4 [shape = 's32[2]{0}', space=sflag, size = 0x8, scoped, tag = 'scoped memory for tpu_custom_call.1']
    #allocation5 [shape = 's32[2]{0}', space=sflag, size = 0x8, scoped, tag = 'scoped memory for tpu_custom_call.1']
    #allocation6 [shape = 'u8[32768]{0}', space=vmem, size = 0x8000, scoped, tag = 'input window, operand 1, single buffered']
    #allocation7 [shape = 's32[1]{0}', space=sflag, size = 0x4, scoped, tag = 'scoped memory for tpu_custom_call.1']
    #allocation8 [shape = 'u8[32768]{0}', space=vmem, size = 0x8000, scoped, tag = 'input window, operand 3, single buffered']
    #allocation9 [shape = 'u8[32768]{0}', space=vmem, size = 0x8000, scoped, tag = 'output window, operand 0']
    #allocation10 [shape = 'u8[8192]{0}', space=vmem, size = 0x2000, scoped, tag = 'output window, operand 1']
    #allocation11 [shape = 's32[2]{0}', space=sflag, size = 0x8, scoped, tag = 'scoped memory for tpu_custom_call.1']
    #allocation12 [shape = 'u8[8192]{0}', space=vmem, size = 0x2000, scoped, tag = 'output window, operand 2']
    %13 = vsyncpa [#allocation4], 0
    %s14 = scalar_lea.sflag [#allocation4], 1
    %15 = vsyncpa %s14, 0
    %16 = vsyncpa [#allocation7], 0
    %17 = vsyncpa [#allocation5], 0
    %s18 = scalar_lea.sflag [#allocation5], 1
    %19 = vsyncpa %s18, 0
    %20 = vsyncpa [#allocation11], 0
    %s21 = scalar_lea.sflag [#allocation11], 1
    %22 = vsyncpa %s21, 0
    loop: start=0, step=1, limit=6
    $region2: #{tpu_custom_call.1} parent=1 // loop_pre_header
      _
    $region3: #{tpu_custom_call.1} parent=1 // loop_header
      %s24 = sphi 0, %s28
      %p25 = scmp.ge.s32.totalorder %s24, 6
      %s31 = sphi 0, %s43
      %s32 = sphi 0, %s39
      %s33 = sphi 0, %s31
      %s34 = sphi 0, %s32
      %s35 = sphi 0, %s33
      %s36 = sphi 0, %s34
      %s48 = sphi 0, %s50
      %s51 = sphi 0, %s48
      %s52 = sphi 0, %s51
      %s68 = sphi 0, %s52
      %s72 = sphi 0, %s72
      %s74 = sphi 0, %s72
      %s75 = sphi 0, %s74
      %s89 = sphi 0, %s75
      %s93 = sphi 0, %s93
      %s95 = sphi 0, %s93
      %s96 = sphi 0, %s95
      %s110 = sphi 0, %s96
      %s114 = sphi 0, %s114
      %s116 = sphi 0, %s114
      %s117 = sphi 0, %s116
      %s131 = sphi 0, %s117
      %s135 = sphi 0, %s135
      %s137 = sphi 0, %s135
      %s138 = sphi 0, %s137
      %s152 = sphi 0, %s138
      %s160 = sphi 0, %s162
      %s163 = sphi 0, %s160
      %s164 = sphi 0, %s163
      %s180 = sphi 0, %s164
      %s186 = sphi 0, %s188
      %s189 = sphi 0, %s186
      %s190 = sphi 0, %s189
      %s206 = sphi 0, %s190
      %s212 = sphi 0, %s214
      %s215 = sphi 0, %s212
      %s216 = sphi 0, %s215
      %s232 = sphi 0, %s216
    $region4: #{tpu_custom_call.1} parent=1 // loop_header_branch
      %27 = sbr.rel (%p25) target = $region8
    $region5: #{tpu_custom_call.1} parent=1 // loop_body
      %s29 = ssub.s32 %s24, 1
      %s30 = ssub.s32 %s24, 2
      %s37 = sadd.s32 1, %s32
      %p38 = scmp.ge.s32.totalorder %s37, 2
      %s39 = scalar_select %p38, 0, %s37
      %s40 = sadd.s32 1, %s31
      %s41 = scalar_select %p38, %s40, %s31
      %p42 = scmp.ge.s32.totalorder %s41, 2
      %s43 = scalar_select %p42, 0, %s41
      %s44 = ssub.s32 %s31, %s43
      %s45 = ssub.s32 %s32, %s39
      %s46 = sor.u32 %s44, %s45
      %p47 = scmp.eq.s32.totalorder %s46, 0
      %s49 = sadd.s32 %s48, 1
      %s50 = scalar_select %p47, %s48, %s49
      %p53 = pneg %p47
      %p54 = scmp.eq.s32.totalorder %s24, 3
      %p55 = por %p53, %p54
      %p56 = scmp.ne.s32.totalorder %s48, %s51
      %p57 = scmp.eq.s32.totalorder %s24, 0
      %p58 = por %p56, %p57
      %p59 = scmp.ne.s32.totalorder %s48, %s51
      %p60 = scmp.eq.s32.totalorder %s29, 3
      %p61 = por %p59, %p60
      %p62 = scmp.ne.s32.totalorder %s51, %s52
      %p63 = scmp.eq.s32.totalorder %s29, 0
      %p64 = por %p62, %p63
      %p65 = scmp.ne.s32.totalorder %s51, %s52
      %p66 = scmp.eq.s32.totalorder %s30, 3
      %p67 = por %p65, %p66
      %p69 = scmp.ne.s32.totalorder %s52, %s68
      %p70 = scmp.eq.s32.totalorder %s30, 0
      %p71 = por %p69, %p70
      %s73 = sadd.s32 %s72, 1
      %p76 = scmp.eq.s32.totalorder %s24, 3
      %p77 = scmp.ne.s32.totalorder %s72, %s74
      %p78 = scmp.eq.s32.totalorder %s24, 0
      %p79 = por %p77, %p78
      %p80 = scmp.ne.s32.totalorder %s72, %s74
      %p81 = scmp.eq.s32.totalorder %s29, 3
      %p82 = por %p80, %p81
      %p83 = scmp.ne.s32.totalorder %s74, %s75
      %p84 = scmp.eq.s32.totalorder %s29, 0
      %p85 = por %p83, %p84
      %p86 = scmp.ne.s32.totalorder %s74, %s75
      %p87 = scmp.eq.s32.totalorder %s30, 3
      %p88 = por %p86, %p87
      %p90 = scmp.ne.s32.totalorder %s75, %s89
      %p91 = scmp.eq.s32.totalorder %s30, 0
      %p92 = por %p90, %p91
      %s94 = sadd.s32 %s93, 1
      %p97 = scmp.eq.s32.totalorder %s24, 3
      %p98 = scmp.ne.s32.totalorder %s93, %s95
      %p99 = scmp.eq.s32.totalorder %s24, 0
      %p100 = por %p98, %p99
      %p101 = scmp.ne.s32.totalorder %s93, %s95
      %p102 = scmp.eq.s32.totalorder %s29, 3
      %p103 = por %p101, %p102
      %p104 = scmp.ne.s32.totalorder %s95, %s96
      %p105 = scmp.eq.s32.totalorder %s29, 0
      %p106 = por %p104, %p105
      %p107 = scmp.ne.s32.totalorder %s95, %s96
      %p108 = scmp.eq.s32.totalorder %s30, 3
      %p109 = por %p107, %p108
      %p111 = scmp.ne.s32.totalorder %s96, %s110
      %p112 = scmp.eq.s32.totalorder %s30, 0
      %p113 = por %p111, %p112
      %s115 = sadd.s32 %s114, 1
      %p118 = scmp.eq.s32.totalorder %s24, 3
      %p119 = scmp.ne.s32.totalorder %s114, %s116
      %p120 = scmp.eq.s32.totalorder %s24, 0
      %p121 = por %p119, %p120
      %p122 = scmp.ne.s32.totalorder %s114, %s116
      %p123 = scmp.eq.s32.totalorder %s29, 3
      %p124 = por %p122, %p123
      %p125 = scmp.ne.s32.totalorder %s116, %s117
      %p126 = scmp.eq.s32.totalorder %s29, 0
      %p127 = por %p125, %p126
      %p128 = scmp.ne.s32.totalorder %s116, %s117
      %p129 = scmp.eq.s32.totalorder %s30, 3
      %p130 = por %p128, %p129
      %p132 = scmp.ne.s32.totalorder %s117, %s131
      %p133 = scmp.eq.s32.totalorder %s30, 0
      %p134 = por %p132, %p133
      %s136 = sadd.s32 %s135, 1
      %p139 = scmp.eq.s32.totalorder %s24, 3
      %p140 = scmp.ne.s32.totalorder %s135, %s137
      %p141 = scmp.eq.s32.totalorder %s24, 0
      %p142 = por %p140, %p141
      %p143 = scmp.ne.s32.totalorder %s135, %s137
      %p144 = scmp.eq.s32.totalorder %s29, 3
      %p145 = por %p143, %p144
      %p146 = scmp.ne.s32.totalorder %s137, %s138
      %p147 = scmp.eq.s32.totalorder %s29, 0
      %p148 = por %p146, %p147
      %p149 = scmp.ne.s32.totalorder %s137, %s138
      %p150 = scmp.eq.s32.totalorder %s30, 3
      %p151 = por %p149, %p150
      %p153 = scmp.ne.s32.totalorder %s138, %s152
      %p154 = scmp.eq.s32.totalorder %s30, 0
      %p155 = por %p153, %p154
      %s156 = ssub.s32 %s31, %s43
      %s157 = ssub.s32 %s32, %s39
      %s158 = sor.u32 %s156, %s157
      %p159 = scmp.eq.s32.totalorder %s158, 0
      %s161 = sadd.s32 %s160, 1
      %s162 = scalar_select %p159, %s160, %s161
      %p165 = pneg %p159
      %p166 = scmp.eq.s32.totalorder %s24, 3
      %p167 = por %p165, %p166
      %p168 = scmp.ne.s32.totalorder %s160, %s163
      %p169 = scmp.eq.s32.totalorder %s24, 0
      %p170 = por %p168, %p169
      %p171 = scmp.ne.s32.totalorder %s160, %s163
      %p172 = scmp.eq.s32.totalorder %s29, 3
      %p173 = por %p171, %p172
      %p174 = scmp.ne.s32.totalorder %s163, %s164
      %p175 = scmp.eq.s32.totalorder %s29, 0
      %p176 = por %p174, %p175
      %p177 = scmp.ne.s32.totalorder %s163, %s164
      %p178 = scmp.eq.s32.totalorder %s30, 3
      %p179 = por %p177, %p178
      %p181 = scmp.ne.s32.totalorder %s164, %s180
      %p182 = scmp.eq.s32.totalorder %s30, 0
      %p183 = por %p181, %p182
      %s184 = ssub.s32 %s31, %s43
      %p185 = scmp.eq.s32.totalorder %s184, 0
      %s187 = sadd.s32 %s186, 1
      %s188 = scalar_select %p185, %s186, %s187
      %p191 = pneg %p185
      %p192 = scmp.eq.s32.totalorder %s24, 3
      %p193 = por %p191, %p192
      %p194 = scmp.ne.s32.totalorder %s186, %s189
      %p195 = scmp.eq.s32.totalorder %s24, 0
      %p196 = por %p194, %p195
      %p197 = scmp.ne.s32.totalorder %s186, %s189
      %p198 = scmp.eq.s32.totalorder %s29, 3
      %p199 = por %p197, %p198
      %p200 = scmp.ne.s32.totalorder %s189, %s190
      %p201 = scmp.eq.s32.totalorder %s29, 0
      %p202 = por %p200, %p201
      %p203 = scmp.ne.s32.totalorder %s189, %s190
      %p204 = scmp.eq.s32.totalorder %s30, 3
      %p205 = por %p203, %p204
      %p207 = scmp.ne.s32.totalorder %s190, %s206
      %p208 = scmp.eq.s32.totalorder %s30, 0
      %p209 = por %p207, %p208
      %s210 = ssub.s32 %s31, %s43
      %p211 = scmp.eq.s32.totalorder %s210, 0
      %s213 = sadd.s32 %s212, 1
      %s214 = scalar_select %p211, %s212, %s213
      %p217 = pneg %p211
      %p218 = scmp.eq.s32.totalorder %s24, 3
      %p219 = por %p217, %p218
      %p220 = scmp.ne.s32.totalorder %s212, %s215
      %p221 = scmp.eq.s32.totalorder %s24, 0
      %p222 = por %p220, %p221
      %p223 = scmp.ne.s32.totalorder %s212, %s215
      %p224 = scmp.eq.s32.totalorder %s29, 3
      %p225 = por %p223, %p224
      %p226 = scmp.ne.s32.totalorder %s215, %s216
      %p227 = scmp.eq.s32.totalorder %s29, 0
      %p228 = por %p226, %p227
      %p229 = scmp.ne.s32.totalorder %s215, %s216
      %p230 = scmp.eq.s32.totalorder %s30, 3
      %p231 = por %p229, %p230
      %p233 = scmp.ne.s32.totalorder %s216, %s232
      %p234 = scmp.eq.s32.totalorder %s30, 0
      %p235 = por %p233, %p234
      %p236 = scmp.le.s32.totalorder 1, %s24
      %p237 = scmp.lt.s32.totalorder %s24, 5
      %p238 = pnand %p236, %p237
      %p239 = pneg %p238
      // Predicated region
      $region9: #{tpu_custom_call.1} parent=5 // pred_check
        _
      $region10: #{tpu_custom_call.1} parent=5 // pred_check_branch
        %241 = sbr.rel (%p238) target = $region12
      $region11: #{tpu_custom_call.1} parent=5 // pred_region
        %s242 = ssub.s32 %s24, 1
        // Predicated region
        $region13: #{tpu_custom_call.1} parent=11 // pred_check
          %p243 = pneg %p85
        $region14: #{tpu_custom_call.1} parent=11 // pred_check_branch
          %245 = sbr.rel (%p243) target = $region16
        $region15: #{tpu_custom_call.1} parent=11 // pred_region
          %s247 = ssub.s32 1024, 1024
          %248 = vsyncadd [#allocation7], %s247
          %s249 = sshll.u32 [#allocation6], 4
          %s250 = int_to_ptr.vmem [resolvable:$true] %s249
          %255 = dma.hbm_to_vmem [thread:$0]  %s1, 1024, %s250, [#allocation7], 64, 64, 4
        $region16: #{tpu_custom_call.1} parent=11 // pred_fallthru
          _
        // Predicated region
        $region17: #{tpu_custom_call.1} parent=11 // pred_check
          %p256 = pneg %p106
        $region18: #{tpu_custom_call.1} parent=11 // pred_check_branch
          %258 = sbr.rel (%p256) target = $region20
        $region19: #{tpu_custom_call.1} parent=11 // pred_region
          _
        $region20: #{tpu_custom_call.1} parent=11 // pred_fallthru
          _
        // Predicated region
        $region21: #{tpu_custom_call.1} parent=11 // pred_check
          %p259 = pneg %p127
        $region22: #{tpu_custom_call.1} parent=11 // pred_check_branch
          %261 = sbr.rel (%p259) target = $region24
        $region23: #{tpu_custom_call.1} parent=11 // pred_region
          %s263 = ssub.s32 1024, 1024
          %264 = vsyncadd [#allocation7], %s263
          %s265 = sshll.u32 [#allocation8], 4
          %s266 = int_to_ptr.vmem [resolvable:$true] %s265
          %271 = dma.hbm_to_vmem [thread:$0]  %s3, 1024, %s266, [#allocation7], 64, 64, 4
        $region24: #{tpu_custom_call.1} parent=11 // pred_fallthru
          _
        // Predicated region
        $region25: #{tpu_custom_call.1} parent=11 // pred_check
          %p272 = pneg %p148
        $region26: #{tpu_custom_call.1} parent=11 // pred_check_branch
          %274 = sbr.rel (%p272) target = $region28
        $region27: #{tpu_custom_call.1} parent=11 // pred_region
          _
        $region28: #{tpu_custom_call.1} parent=11 // pred_fallthru
          _
      $region12: #{tpu_custom_call.1} parent=5 // pred_fallthru
        _
      %p275 = scmp.lt.s32.totalorder %s24, 4
      // Predicated region
      $region29: #{tpu_custom_call.1} parent=5 // pred_check
        %p276 = pneg %p275
      $region30: #{tpu_custom_call.1} parent=5 // pred_check_branch
        %278 = sbr.rel (%p276) target = $region32
      $region31: #{tpu_custom_call.1} parent=5 // pred_region
        // Predicated region
        $region33: #{tpu_custom_call.1} parent=31 // pred_check
          %p279 = pneg %p58
        $region34: #{tpu_custom_call.1} parent=31 // pred_check_branch
          %281 = sbr.rel (%p279) target = $region36
        $region35: #{tpu_custom_call.1} parent=31 // pred_region
          %s282 = sand.u32 %s48, 1
          %s283 = scalar_lea.sflag [#allocation4], %s282
          %s284 = sand.u32 %s48, 1
          %s285 = smul.addr %s284, 32
          %s286 = scalar_lea.vmem [#allocation3], %s285
          %s287 = smul.u32 8, %s31
          %s289 = ssub.s32 512, 512
          %290 = vsyncadd %s283, %s289
          %s291 = smul.addr %s287, 2
          %s292 = sadd.s32 %s32, %s291
          %s293 = smul.addr %s292, 64
          %s294 = scalar_lea.hbm %s0, %s293
          %s295 = sshll.u32 %s286, 4
          %s296 = int_to_ptr.vmem [resolvable:$true] %s295
          %301 = dma.hbm_to_vmem [thread:$0]  %s294, 512, %s296, %s283, 128, 64, 4
        $region36: #{tpu_custom_call.1} parent=31 // pred_fallthru
          _
      $region32: #{tpu_custom_call.1} parent=5 // pred_fallthru
        _
      %p302 = scmp.le.s32.totalorder 1, %s24
      %p303 = scmp.lt.s32.totalorder %s24, 5
      %p304 = pnand %p302, %p303
      %p305 = pneg %p304
      // Predicated region
      $region37: #{tpu_custom_call.1} parent=5 // pred_check
        _
      $region38: #{tpu_custom_call.1} parent=5 // pred_check_branch
        %307 = sbr.rel (%p304) target = $region40
      $region39: #{tpu_custom_call.1} parent=5 // pred_region
        %s308 = ssub.s32 %s24, 1
        %s309 = sand.u32 %s51, 1
        %s310 = scalar_lea.sflag [#allocation4], %s309
        %s311 = sand.u32 %s51, 1
        %s312 = smul.addr %s311, 32
        %s313 = scalar_lea.vmem [#allocation3], %s312
        // Predicated region
        $region41: #{tpu_custom_call.1} parent=39 // pred_check
          %p314 = pneg %p64
        $region42: #{tpu_custom_call.1} parent=39 // pred_check_branch
          %316 = sbr.rel (%p314) target = $region44
        $region43: #{tpu_custom_call.1} parent=39 // pred_region
          %317 = dma.done %s310, 512
        $region44: #{tpu_custom_call.1} parent=39 // pred_fallthru
          _
        // Predicated region
        $region45: #{tpu_custom_call.1} parent=39 // pred_check
          %p318 = pneg %p85
        $region46: #{tpu_custom_call.1} parent=39 // pred_check_branch
          %320 = sbr.rel (%p318) target = $region48
        $region47: #{tpu_custom_call.1} parent=39 // pred_region
          %321 = dma.done [#allocation7], 1024
        $region48: #{tpu_custom_call.1} parent=39 // pred_fallthru
          _
        // Predicated region
        $region49: #{tpu_custom_call.1} parent=39 // pred_check
          %p322 = pneg %p127
        $region50: #{tpu_custom_call.1} parent=39 // pred_check_branch
          %324 = sbr.rel (%p322) target = $region52
        $region51: #{tpu_custom_call.1} parent=39 // pred_region
          %325 = dma.done [#allocation7], 1024
        $region52: #{tpu_custom_call.1} parent=39 // pred_fallthru
          _
        %s326 = sand.u32 %s51, 1
        %s327 = scalar_lea.sflag [#allocation4], %s326
        %s328 = sand.u32 %s51, 1
        %s329 = smul.addr %s328, 32
        %s330 = scalar_lea.vmem [#allocation3], %s329
        %p331 = pneg %p64
        %p332 = pneg %p61
        %p333 = pneg %p85
        %p334 = pneg %p82
        %p335 = pneg %p106
        %p336 = pneg %p103
        %p337 = pneg %p127
        %p338 = pneg %p124
        %p339 = pneg %p148
        %p340 = pneg %p145
        %p341 = pneg %p176
        %p342 = pneg %p173
        %s343 = sand.u32 %s163, 1
        %s344 = scalar_lea.sflag [#allocation5], %s343
        %s345 = sand.u32 %s163, 1
        %s346 = smul.addr %s345, 32
        %s347 = scalar_lea.vmem [#allocation9], %s346
        %p348 = pneg %p202
        %p349 = pneg %p199
        %s350 = sand.u32 %s29, 1
        %s351 = scalar_lea.sflag [#allocation11], %s350
        %s352 = sand.u32 %s189, 1
        %s353 = smul.addr %s352, 8
        %s354 = scalar_lea.vmem [#allocation10], %s353
        %p355 = pneg %p228
        %p356 = pneg %p225
        %s357 = sand.u32 %s29, 1
        %s358 = scalar_lea.sflag [#allocation11], %s357
        %s359 = sand.u32 %s215, 1
        %s360 = smul.addr %s359, 8
        %s361 = scalar_lea.vmem [#allocation12], %s360
        %s362 = smul.u32 8, %s33
        %s363 = smul.u32 8, %s33
        %v365 = vld [vmem:[%s313] sm:$0xf]
        %v366 = vld [vmem:[%s313 + $0x4] sm:$0xf]
        %v367 = vld [vmem:[%s313 + $0x8] sm:$0xf]
        %v368 = vld [vmem:[%s313 + $0xc] sm:$0xf]
        %v369 = vld [vmem:[%s313 + $0x10] sm:$0xf]
        %v370 = vld [vmem:[%s313 + $0x14] sm:$0xf]
        %v371 = vld [vmem:[%s313 + $0x18] sm:$0xf]
        %v372 = vld [vmem:[%s313 + $0x1c] sm:$0xf]
        %v373 = vld [vmem:[#allocation6] sm:$0xf]
        %v374 = vld [vmem:[#allocation6 + $0x4] sm:$0xf]
        %v375 = vld [vmem:[#allocation6 + $0x8] sm:$0xf]
        %v376 = vld [vmem:[#allocation6 + $0xc] sm:$0xf]
        %v377 = vld [vmem:[#allocation6 + $0x10] sm:$0xf]
        %v378 = vld [vmem:[#allocation6 + $0x14] sm:$0xf]
        %v379 = vld [vmem:[#allocation6 + $0x18] sm:$0xf]
        %v380 = vld [vmem:[#allocation6 + $0x1c] sm:$0xf]
        %v381 = vld [vmem:[#allocation6 + $0x20] sm:$0xf]
        %v382 = vld [vmem:[#allocation6 + $0x24] sm:$0xf]
        %v383 = vld [vmem:[#allocation6 + $0x28] sm:$0xf]
        %v384 = vld [vmem:[#allocation6 + $0x2c] sm:$0xf]
        %v385 = vld [vmem:[#allocation6 + $0x30] sm:$0xf]
        %v386 = vld [vmem:[#allocation6 + $0x34] sm:$0xf]
        %v387 = vld [vmem:[#allocation6 + $0x38] sm:$0xf]
        %v388 = vld [vmem:[#allocation6 + $0x3c] sm:$0xf]
        %v389 = vld [vmem:[%s2] sm:$0x1]
        %v391 = vlaneseq
        %v392 = vshrl.u32 %v391, 7
        %v393 = vsub.s32 0, %v392
        %v394 = vrot.slane %v389, %v393
        %v404 = vunpack.c.l.b16 %v365
        %v405 = vunpack.c.l.b16 %v366
        %v406 = vunpack.c.l.b16 %v367
        %v407 = vunpack.c.l.b16 %v368
        %v408 = vunpack.c.l.b16 %v369
        %v409 = vunpack.c.l.b16 %v370
        %v410 = vunpack.c.l.b16 %v371
        %v411 = vunpack.c.l.b16 %v372
        %v412 = vpack.c.b16 %v405, %v404
        %v413 = vpack.c.b16 %v407, %v406
        %v414 = vpack.c.b16 %v409, %v408
        %v415 = vpack.c.b16 %v411, %v410
        %v436 = vunpack.c.l.b16 %v373
        %v437 = vunpack.c.l.b16 %v374
        %v438 = vunpack.c.l.b16 %v375
        %v439 = vunpack.c.l.b16 %v376
        %v440 = vunpack.c.l.b16 %v377
        %v441 = vunpack.c.l.b16 %v378
        %v442 = vunpack.c.l.b16 %v379
        %v443 = vunpack.c.l.b16 %v380
        %v444 = vunpack.c.l.b16 %v381
        %v445 = vunpack.c.l.b16 %v382
        %v446 = vunpack.c.l.b16 %v383
        %v447 = vunpack.c.l.b16 %v384
        %v448 = vunpack.c.l.b16 %v385
        %v449 = vunpack.c.l.b16 %v386
        %v450 = vunpack.c.l.b16 %v387
        %v451 = vunpack.c.l.b16 %v388
        %v452 = vpack.c.b16 %v437, %v436
        %v453 = vpack.c.b16 %v439, %v438
        %v454 = vpack.c.b16 %v441, %v440
        %v455 = vpack.c.b16 %v443, %v442
        %v456 = vpack.c.b16 %v445, %v444
        %v457 = vpack.c.b16 %v447, %v446
        %v458 = vpack.c.b16 %v449, %v448
        %v459 = vpack.c.b16 %v451, %v450
        %468 = vmatprep.subr.bf16.mxu0 0
        %469 = vmatpush1.bf16.msra.mxu0 %v452
        %470 = vmatprep.subr.bf16.mxu0 0
        %471 = vmatpush1.bf16.msra.mxu0 %v453
        %472 = vmatprep.subr.bf16.mxu0 0
        %473 = vmatpush1.bf16.msra.mxu0 %v454
        %474 = vmatprep.subr.bf16.mxu0 0
        %475 = vmatpush1.bf16.msra.mxu0 %v455
        %476 = vmatprep.subr.bf16.mxu0 0
        %477 = vmatpush1.bf16.msra.mxu0 %v456
        %478 = vmatprep.subr.bf16.mxu0 0
        %479 = vmatpush1.bf16.msra.mxu0 %v457
        %480 = vmatprep.subr.bf16.mxu0 0
        %481 = vmatpush1.bf16.msra.mxu0 %v458
        %482 = vmatprep.subr.bf16.mxu0 0
        %483 = vmatpush1.bf16.msra.mxu0 %v459
        %484 = vmatprep.subr.bf16.mxu0 0
        %485 = vmatpush1.bf16.msra.mxu0 0
        %486 = vmatprep.subr.bf16.mxu0 0
        %487 = vmatpush1.bf16.msra.mxu0 0
        %488 = vmatprep.subr.bf16.mxu0 0
        %489 = vmatpush1.bf16.msra.mxu0 0
        %490 = vmatprep.subr.bf16.mxu0 0
        %491 = vmatpush1.bf16.msra.mxu0 0
        %492 = vmatprep.subr.bf16.mxu0 0
        %493 = vmatpush1.bf16.msra.mxu0 0
        %494 = vmatprep.subr.bf16.mxu0 0
        %495 = vmatpush1.bf16.msra.mxu0 0
        %496 = vmatprep.subr.bf16.mxu0 0
        %497 = vmatpush1.bf16.msra.mxu0 0
        %498 = vmatprep.subr.bf16.mxu0 0
        %499 = vmatpush1.bf16.msra.mxu0 0
        %500 = vmatprep.mubr.bf16.mxu0 0
        %501 = vmatmul.mubr.bf16.gmra.mrb[0].mxu0 %v412
        %v502 = vpop.f32.mrb[0].mxu0
        %v503 = vadd.f32 %v394, %v502
        %v504 = vpop.f32.mrb[0].mxu0
        %v505 = vpop.f32.mrb[0].mxu0
        %v506 = vadd.f32 %v394, %v505
        %v507 = vpop.f32.mrb[0].mxu0
        %508 = vmatprep.mubr.bf16.mxu0 0
        %509 = vmatmul.mubr.bf16.gmra.mrb[0].mxu0 %v413
        %v510 = vpop.f32.mrb[0].mxu0
        %v511 = vadd.f32 %v394, %v510
        %v512 = vpop.f32.mrb[0].mxu0
        %v513 = vpop.f32.mrb[0].mxu0
        %v514 = vadd.f32 %v394, %v513
        %v515 = vpop.f32.mrb[0].mxu0
        %516 = vmatprep.mubr.bf16.mxu0 0
        %517 = vmatmul.mubr.bf16.gmra.mrb[0].mxu0 %v414
        %v518 = vpop.f32.mrb[0].mxu0
        %v519 = vadd.f32 %v394, %v518
        %v520 = vpop.f32.mrb[0].mxu0
        %v521 = vpop.f32.mrb[0].mxu0
        %v522 = vadd.f32 %v394, %v521
        %v523 = vpop.f32.mrb[0].mxu0
        %524 = vmatprep.mubr.bf16.mxu0 0
        %525 = vmatmul.mubr.bf16.gmra.mrb[0].mxu0 %v415
        %v526 = vpop.f32.mrb[0].mxu0
        %v527 = vadd.f32 %v394, %v526
        %v528 = vpop.f32.mrb[0].mxu0
        %v529 = vpop.f32.mrb[0].mxu0
        %v530 = vadd.f32 %v394, %v529
        %v531 = vpop.f32.mrb[0].mxu0
        %532 = vdwg.mxu0
        %v533 = vpack.c.bf16 %v503, %v503
        %v534 = vpack.c.bf16 %v506, %v506
        %v535 = vpack.c.bf16 %v511, %v511
        %v536 = vpack.c.bf16 %v514, %v514
        %v537 = vpack.c.bf16 %v519, %v519
        %v538 = vpack.c.bf16 %v522, %v522
        %v539 = vpack.c.bf16 %v527, %v527
        %v540 = vpack.c.bf16 %v530, %v530
        %541 = vst [vmem:[%s347] sm:$0xf] %v533
        %542 = vst [vmem:[%s347 + $0x4] sm:$0xf] %v534
        %543 = vst [vmem:[%s347 + $0x8] sm:$0xf] %v535
        %544 = vst [vmem:[%s347 + $0xc] sm:$0xf] %v536
        %545 = vst [vmem:[%s347 + $0x10] sm:$0xf] %v537
        %546 = vst [vmem:[%s347 + $0x14] sm:$0xf] %v538
        %547 = vst [vmem:[%s347 + $0x18] sm:$0xf] %v539
        %548 = vst [vmem:[%s347 + $0x1c] sm:$0xf] %v540
        %p549 = scmp.eq.s32.totalorder %s34, 0
        // Predicated region
        $region53: #{tpu_custom_call.1} parent=39 // pred_check
          %p550 = pneg %p549
        $region54: #{tpu_custom_call.1} parent=39 // pred_check_branch
          %552 = sbr.rel (%p550) target = $region56
        $region55: #{tpu_custom_call.1} parent=39 // pred_region
          %553 = vst [vmem:[#allocation2] sm:$0xff] 0.0
        $region56: #{tpu_custom_call.1} parent=39 // pred_fallthru
          _
        %v554 = vld [vmem:[#allocation2] sm:$0xff]
        %v555 = vunpack.c.l.bf16 %v365
        %v556 = vunpack.c.l.bf16 %v366
        %v557 = vunpack.c.l.bf16 %v367
        %v558 = vunpack.c.l.bf16 %v368
        %v559 = vunpack.c.l.bf16 %v369
        %v560 = vunpack.c.l.bf16 %v370
        %v561 = vunpack.c.l.bf16 %v371
        %v562 = vunpack.c.l.bf16 %v372
        %v563 = vrot.slane %v555, 4
        %v564 = vadd.f32 %v555, %v563
        %v565 = vrot.slane %v564, 2
        %v566 = vadd.f32 %v564, %v565
        %v567 = vrot.slane %v566, 1
        %v568 = vadd.f32 %v566, %v567
        %v569 = vrot.slane %v556, 4
        %v570 = vadd.f32 %v556, %v569
        %v571 = vrot.slane %v570, 2
        %v572 = vadd.f32 %v570, %v571
        %v573 = vrot.slane %v572, 1
        %v574 = vadd.f32 %v572, %v573
        %v575 = vrot.slane %v557, 4
        %v576 = vadd.f32 %v557, %v575
        %v577 = vrot.slane %v576, 2
        %v578 = vadd.f32 %v576, %v577
        %v579 = vrot.slane %v578, 1
        %v580 = vadd.f32 %v578, %v579
        %v581 = vrot.slane %v558, 4
        %v582 = vadd.f32 %v558, %v581
        %v583 = vrot.slane %v582, 2
        %v584 = vadd.f32 %v582, %v583
        %v585 = vrot.slane %v584, 1
        %v586 = vadd.f32 %v584, %v585
        %v587 = vrot.slane %v559, 4
        %v588 = vadd.f32 %v559, %v587
        %v589 = vrot.slane %v588, 2
        %v590 = vadd.f32 %v588, %v589
        %v591 = vrot.slane %v590, 1
        %v592 = vadd.f32 %v590, %v591
        %v593 = vrot.slane %v560, 4
        %v594 = vadd.f32 %v560, %v593
        %v595 = vrot.slane %v594, 2
        %v596 = vadd.f32 %v594, %v595
        %v597 = vrot.slane %v596, 1
        %v598 = vadd.f32 %v596, %v597
        %v599 = vrot.slane %v561, 4
        %v600 = vadd.f32 %v561, %v599
        %v601 = vrot.slane %v600, 2
        %v602 = vadd.f32 %v600, %v601
        %v603 = vrot.slane %v602, 1
        %v604 = vadd.f32 %v602, %v603
        %v605 = vrot.slane %v562, 4
        %v606 = vadd.f32 %v562, %v605
        %v607 = vrot.slane %v606, 2
        %v608 = vadd.f32 %v606, %v607
        %v609 = vrot.slane %v608, 1
        %v610 = vadd.f32 %v608, %v609
        %vm619 = vcmask 1041409
        %v620 = vsel %vm619, %v574, %v568
        %vm621 = vcmask 1042434
        %v622 = vsel %vm621, %v580, %v620
        %vm623 = vcmask 1043459
        %v624 = vsel %vm623, %v586, %v622
        %vm625 = vcmask 1044484
        %v626 = vsel %vm625, %v592, %v624
        %vm627 = vcmask 1045509
        %v628 = vsel %vm627, %v598, %v626
        %vm629 = vcmask 1046534
        %v630 = vsel %vm629, %v604, %v628
        %vm631 = vcmask 1047559
        %v632 = vsel %vm631, %v610, %v630
        %v634 = vadd.f32 %v554, %v632
        %635 = vst [vmem:[#allocation2] sm:$0xff] %v634
        %p636 = scmp.eq.s32.totalorder %s34, 1
        // Predicated region
        $region57: #{tpu_custom_call.1} parent=39 // pred_check
          %p637 = pneg %p636
        $region58: #{tpu_custom_call.1} parent=39 // pred_check_branch
          %639 = sbr.rel (%p637) target = $region60
        $region59: #{tpu_custom_call.1} parent=39 // pred_region
          %v640 = vld [vmem:[#allocation2] sm:$0xff]
          %v641 = vmul.f32 %v640, 0.0625
          %v642 = vpack.c.bf16 %v641, %v641
          %v643 = vld [vmem:[#allocation6] sm:$0xf]
          %v644 = vld [vmem:[#allocation6 + $0x4] sm:$0xf]
          %v645 = vld [vmem:[#allocation6 + $0x8] sm:$0xf]
          %v646 = vld [vmem:[#allocation6 + $0xc] sm:$0xf]
          %v647 = vld [vmem:[#allocation6 + $0x10] sm:$0xf]
          %v648 = vld [vmem:[#allocation6 + $0x14] sm:$0xf]
          %v649 = vld [vmem:[#allocation6 + $0x18] sm:$0xf]
          %v650 = vld [vmem:[#allocation6 + $0x1c] sm:$0xf]
          %v651 = vld [vmem:[#allocation6 + $0x20] sm:$0xf]
          %v652 = vld [vmem:[#allocation6 + $0x24] sm:$0xf]
          %v653 = vld [vmem:[#allocation6 + $0x28] sm:$0xf]
          %v654 = vld [vmem:[#allocation6 + $0x2c] sm:$0xf]
          %v655 = vld [vmem:[#allocation6 + $0x30] sm:$0xf]
          %v656 = vld [vmem:[#allocation6 + $0x34] sm:$0xf]
          %v657 = vld [vmem:[#allocation6 + $0x38] sm:$0xf]
          %v658 = vld [vmem:[#allocation6 + $0x3c] sm:$0xf]
          %v659 = vld [vmem:[%s2] sm:$0x1]
          %v661 = vlaneseq
          %v662 = vshrl.u32 %v661, 7
          %v663 = vsub.s32 0, %v662
          %v664 = vrot.slane %v659, %v663
          %v682 = vunpack.c.l.b16 %v643
          %v683 = vunpack.c.l.b16 %v644
          %v684 = vunpack.c.l.b16 %v645
          %v685 = vunpack.c.l.b16 %v646
          %v686 = vunpack.c.l.b16 %v647
          %v687 = vunpack.c.l.b16 %v648
          %v688 = vunpack.c.l.b16 %v649
          %v689 = vunpack.c.l.b16 %v650
          %v690 = vunpack.c.l.b16 %v651
          %v691 = vunpack.c.l.b16 %v652
          %v692 = vunpack.c.l.b16 %v653
          %v693 = vunpack.c.l.b16 %v654
          %v694 = vunpack.c.l.b16 %v655
          %v695 = vunpack.c.l.b16 %v656
          %v696 = vunpack.c.l.b16 %v657
          %v697 = vunpack.c.l.b16 %v658
          %v698 = vpack.c.b16 %v683, %v682
          %v699 = vpack.c.b16 %v685, %v684
          %v700 = vpack.c.b16 %v687, %v686
          %v701 = vpack.c.b16 %v689, %v688
          %v702 = vpack.c.b16 %v691, %v690
          %v703 = vpack.c.b16 %v693, %v692
          %v704 = vpack.c.b16 %v695, %v694
          %v705 = vpack.c.b16 %v697, %v696
          %714 = vmatprep.subr.bf16.mxu0 0
          %715 = vmatpush1.bf16.msra.mxu0 %v698
          %716 = vmatprep.subr.bf16.mxu0 0
          %717 = vmatpush1.bf16.msra.mxu0 %v699
          %718 = vmatprep.subr.bf16.mxu0 0
          %719 = vmatpush1.bf16.msra.mxu0 %v700
          %720 = vmatprep.subr.bf16.mxu0 0
          %721 = vmatpush1.bf16.msra.mxu0 %v701
          %722 = vmatprep.subr.bf16.mxu0 0
          %723 = vmatpush1.bf16.msra.mxu0 %v702
          %724 = vmatprep.subr.bf16.mxu0 0
          %725 = vmatpush1.bf16.msra.mxu0 %v703
          %726 = vmatprep.subr.bf16.mxu0 0
          %727 = vmatpush1.bf16.msra.mxu0 %v704
          %728 = vmatprep.subr.bf16.mxu0 0
          %729 = vmatpush1.bf16.msra.mxu0 %v705
          %730 = vmatprep.subr.bf16.mxu0 0
          %731 = vmatpush1.bf16.msra.mxu0 0
          %732 = vmatprep.subr.bf16.mxu0 0
          %733 = vmatpush1.bf16.msra.mxu0 0
          %734 = vmatprep.subr.bf16.mxu0 0
          %735 = vmatpush1.bf16.msra.mxu0 0
          %736 = vmatprep.subr.bf16.mxu0 0
          %737 = vmatpush1.bf16.msra.mxu0 0
          %738 = vmatprep.subr.bf16.mxu0 0
          %739 = vmatpush1.bf16.msra.mxu0 0
          %740 = vmatprep.subr.bf16.mxu0 0
          %741 = vmatpush1.bf16.msra.mxu0 0
          %742 = vmatprep.subr.bf16.mxu0 0
          %743 = vmatpush1.bf16.msra.mxu0 0
          %744 = vmatprep.subr.bf16.mxu0 0
          %745 = vmatpush1.bf16.msra.mxu0 0
          %746 = vmatprep.mubr.bf16.mxu0 0
          %747 = vmatmul.mubr.bf16.gmra.mrb[0].mxu0 %v642
          %v748 = vpop.f32.mrb[0].mxu0
          %v749 = vadd.f32 %v664, %v748
          %v750 = vpop.f32.mrb[0].mxu0
          %v751 = vpop.f32.mrb[0].mxu0
          %v752 = vpop.f32.mrb[0].mxu0
          %753 = vdwg.mxu0
          %754 = vst [vmem:[%s354] sm:$0xff] %v749
          %v755 = vpack.c.bf16 %v749, %v749
          %v756 = vld [vmem:[#allocation8] sm:$0xf]
          %v757 = vld [vmem:[#allocation8 + $0x4] sm:$0xf]
          %v758 = vld [vmem:[#allocation8 + $0x8] sm:$0xf]
          %v759 = vld [vmem:[#allocation8 + $0xc] sm:$0xf]
          %v760 = vld [vmem:[#allocation8 + $0x10] sm:$0xf]
          %v761 = vld [vmem:[#allocation8 + $0x14] sm:$0xf]
          %v762 = vld [vmem:[#allocation8 + $0x18] sm:$0xf]
          %v763 = vld [vmem:[#allocation8 + $0x1c] sm:$0xf]
          %v764 = vld [vmem:[#allocation8 + $0x20] sm:$0xf]
          %v765 = vld [vmem:[#allocation8 + $0x24] sm:$0xf]
          %v766 = vld [vmem:[#allocation8 + $0x28] sm:$0xf]
          %v767 = vld [vmem:[#allocation8 + $0x2c] sm:$0xf]
          %v768 = vld [vmem:[#allocation8 + $0x30] sm:$0xf]
          %v769 = vld [vmem:[#allocation8 + $0x34] sm:$0xf]
          %v770 = vld [vmem:[#allocation8 + $0x38] sm:$0xf]
          %v771 = vld [vmem:[#allocation8 + $0x3c] sm:$0xf]
          %v772 = vld [vmem:[%s4] sm:$0x1]
          %v774 = vlaneseq
          %v775 = vshrl.u32 %v774, 7
          %v776 = vsub.s32 0, %v775
          %v777 = vrot.slane %v772, %v776
          %v795 = vunpack.c.l.b16 %v756
          %v796 = vunpack.c.l.b16 %v757
          %v797 = vunpack.c.l.b16 %v758
          %v798 = vunpack.c.l.b16 %v759
          %v799 = vunpack.c.l.b16 %v760
          %v800 = vunpack.c.l.b16 %v761
          %v801 = vunpack.c.l.b16 %v762
          %v802 = vunpack.c.l.b16 %v763
          %v803 = vunpack.c.l.b16 %v764
          %v804 = vunpack.c.l.b16 %v765
          %v805 = vunpack.c.l.b16 %v766
          %v806 = vunpack.c.l.b16 %v767
          %v807 = vunpack.c.l.b16 %v768
          %v808 = vunpack.c.l.b16 %v769
          %v809 = vunpack.c.l.b16 %v770
          %v810 = vunpack.c.l.b16 %v771
          %v811 = vpack.c.b16 %v796, %v795
          %v812 = vpack.c.b16 %v798, %v797
          %v813 = vpack.c.b16 %v800, %v799
          %v814 = vpack.c.b16 %v802, %v801
          %v815 = vpack.c.b16 %v804, %v803
          %v816 = vpack.c.b16 %v806, %v805
          %v817 = vpack.c.b16 %v808, %v807
          %v818 = vpack.c.b16 %v810, %v809
          %827 = vmatprep.subr.bf16.mxu0 0
          %828 = vmatpush1.bf16.msra.mxu0 %v811
          %829 = vmatprep.subr.bf16.mxu0 0
          %830 = vmatpush1.bf16.msra.mxu0 %v812
          %831 = vmatprep.subr.bf16.mxu0 0
          %832 = vmatpush1.bf16.msra.mxu0 %v813
          %833 = vmatprep.subr.bf16.mxu0 0
          %834 = vmatpush1.bf16.msra.mxu0 %v814
          %835 = vmatprep.subr.bf16.mxu0 0
          %836 = vmatpush1.bf16.msra.mxu0 %v815
          %837 = vmatprep.subr.bf16.mxu0 0
          %838 = vmatpush1.bf16.msra.mxu0 %v816
          %839 = vmatprep.subr.bf16.mxu0 0
          %840 = vmatpush1.bf16.msra.mxu0 %v817
          %841 = vmatprep.subr.bf16.mxu0 0
          %842 = vmatpush1.bf16.msra.mxu0 %v818
          %843 = vmatprep.subr.bf16.mxu0 0
          %844 = vmatpush1.bf16.msra.mxu0 0
          %845 = vmatprep.subr.bf16.mxu0 0
          %846 = vmatpush1.bf16.msra.mxu0 0
          %847 = vmatprep.subr.bf16.mxu0 0
          %848 = vmatpush1.bf16.msra.mxu0 0
          %849 = vmatprep.subr.bf16.mxu0 0
          %850 = vmatpush1.bf16.msra.mxu0 0
          %851 = vmatprep.subr.bf16.mxu0 0
          %852 = vmatpush1.bf16.msra.mxu0 0
          %853 = vmatprep.subr.bf16.mxu0 0
          %854 = vmatpush1.bf16.msra.mxu0 0
          %855 = vmatprep.subr.bf16.mxu0 0
          %856 = vmatpush1.bf16.msra.mxu0 0
          %857 = vmatprep.subr.bf16.mxu0 0
          %858 = vmatpush1.bf16.msra.mxu0 0
          %859 = vmatprep.mubr.bf16.mxu0 0
          %860 = vmatmul.mubr.bf16.gmra.mrb[0].mxu0 %v755
          %v861 = vpop.f32.mrb[0].mxu0
          %v862 = vadd.f32 %v777, %v861
          %v863 = vpop.f32.mrb[0].mxu0
          %v864 = vpop.f32.mrb[0].mxu0
          %v865 = vpop.f32.mrb[0].mxu0
          %866 = vdwg.mxu0
          %867 = vst [vmem:[%s361] sm:$0xff] %v862
        $region60: #{tpu_custom_call.1} parent=39 // pred_fallthru
          _
        %s868 = sand.u32 %s163, 1
        %s869 = scalar_lea.sflag [#allocation5], %s868
        %s870 = sand.u32 %s163, 1
        %s871 = smul.addr %s870, 32
        %s872 = scalar_lea.vmem [#allocation9], %s871
        %s873 = sand.u32 %s29, 1
        %s874 = scalar_lea.sflag [#allocation11], %s873
        %s875 = sand.u32 %s189, 1
        %s876 = smul.addr %s875, 8
        %s877 = scalar_lea.vmem [#allocation10], %s876
        %s878 = sand.u32 %s29, 1
        %s879 = scalar_lea.sflag [#allocation11], %s878
        %s880 = sand.u32 %s215, 1
        %s881 = smul.addr %s880, 8
        %s882 = scalar_lea.vmem [#allocation12], %s881
        // Predicated region
        $region61: #{tpu_custom_call.1} parent=39 // pred_check
          %p883 = pneg %p173
        $region62: #{tpu_custom_call.1} parent=39 // pred_check_branch
          %885 = sbr.rel (%p883) target = $region64
        $region63: #{tpu_custom_call.1} parent=39 // pred_region
          %s886 = smul.u32 8, %s33
          %s888 = ssub.s32 512, 512
          %889 = vsyncadd %s869, %s888
          %s890 = smul.addr %s886, 2
          %s891 = sadd.s32 %s34, %s890
          %s892 = smul.addr %s891, 64
          %s893 = scalar_lea.hbm %s5, %s892
          %s894 = sshll.u32 %s872, 4
          %s895 = int_to_ptr.vmem [resolvable:$true] %s894
          %900 = dma.vmem_to_hbm [thread:$0]  %s895, 512, %s893, %s869, 64, 128, 4
        $region64: #{tpu_custom_call.1} parent=39 // pred_fallthru
          _
        // Predicated region
        $region65: #{tpu_custom_call.1} parent=39 // pred_check
          %p901 = pneg %p199
        $region66: #{tpu_custom_call.1} parent=39 // pred_check_branch
          %903 = sbr.rel (%p901) target = $region68
        $region67: #{tpu_custom_call.1} parent=39 // pred_region
          %s905 = ssub.s32 128, 128
          %906 = vsyncadd %s874, %s905
          %s907 = smul.addr %s33, 128
          %s908 = scalar_lea.hbm %s6, %s907
          %s910 = sshll.u32 %s877, 4
          %s911 = int_to_ptr.vmem [resolvable:$true] %s910
          %913 = dma.vmem_to_hbm [thread:$0]  %s911, 128, %s908, %s874
        $region68: #{tpu_custom_call.1} parent=39 // pred_fallthru
          _
        // Predicated region
        $region69: #{tpu_custom_call.1} parent=39 // pred_check
          %p914 = pneg %p225
        $region70: #{tpu_custom_call.1} parent=39 // pred_check_branch
          %916 = sbr.rel (%p914) target = $region72
        $region71: #{tpu_custom_call.1} parent=39 // pred_region
          %s918 = ssub.s32 128, 128
          %919 = vsyncadd %s879, %s918
          %s920 = smul.addr %s33, 128
          %s921 = scalar_lea.hbm %s7, %s920
          %s923 = sshll.u32 %s882, 4
          %s924 = int_to_ptr.vmem [resolvable:$true] %s923
          %926 = dma.vmem_to_hbm [thread:$0]  %s924, 128, %s921, %s879
        $region72: #{tpu_custom_call.1} parent=39 // pred_fallthru
          _
      $region40: #{tpu_custom_call.1} parent=5 // pred_fallthru
        _
      %p927 = scmp.le.s32.totalorder 2, %s24
      // Predicated region
      $region73: #{tpu_custom_call.1} parent=5 // pred_check
        %p928 = pneg %p927
      $region74: #{tpu_custom_call.1} parent=5 // pred_check_branch
        %930 = sbr.rel (%p928) target = $region76
      $region75: #{tpu_custom_call.1} parent=5 // pred_region
        %s931 = ssub.s32 %s24, 2
        // Predicated region
        $region77: #{tpu_custom_call.1} parent=75 // pred_check
          %p932 = pneg %p179
        $region78: #{tpu_custom_call.1} parent=75 // pred_check_branch
          %934 = sbr.rel (%p932) target = $region80
        $region79: #{tpu_custom_call.1} parent=75 // pred_region
          %s935 = sand.u32 %s164, 1
          %s936 = scalar_lea.sflag [#allocation5], %s935
          %s937 = sand.u32 %s164, 1
          %s938 = smul.addr %s937, 32
          %s939 = scalar_lea.vmem [#allocation9], %s938
          %940 = dma.done %s936, 512
        $region80: #{tpu_custom_call.1} parent=75 // pred_fallthru
          _
        // Predicated region
        $region81: #{tpu_custom_call.1} parent=75 // pred_check
          %p941 = pneg %p205
        $region82: #{tpu_custom_call.1} parent=75 // pred_check_branch
          %943 = sbr.rel (%p941) target = $region84
        $region83: #{tpu_custom_call.1} parent=75 // pred_region
          %s944 = sand.u32 %s30, 1
          %s945 = scalar_lea.sflag [#allocation11], %s944
          %s946 = sand.u32 %s190, 1
          %s947 = smul.addr %s946, 8
          %s948 = scalar_lea.vmem [#allocation10], %s947
          %949 = dma.done %s945, 128
        $region84: #{tpu_custom_call.1} parent=75 // pred_fallthru
          _
        // Predicated region
        $region85: #{tpu_custom_call.1} parent=75 // pred_check
          %p950 = pneg %p231
        $region86: #{tpu_custom_call.1} parent=75 // pred_check_branch
          %952 = sbr.rel (%p950) target = $region88
        $region87: #{tpu_custom_call.1} parent=75 // pred_region
          %s953 = sand.u32 %s30, 1
          %s954 = scalar_lea.sflag [#allocation11], %s953
          %s955 = sand.u32 %s216, 1
          %s956 = smul.addr %s955, 8
          %s957 = scalar_lea.vmem [#allocation12], %s956
          %958 = dma.done %s954, 128
        $region88: #{tpu_custom_call.1} parent=75 // pred_fallthru
          _
      $region76: #{tpu_custom_call.1} parent=5 // pred_fallthru
        _
    $region6: #{tpu_custom_call.1} parent=1 // loop_footer
      %s28 = sadd.s32 1, %s24
    $region7: #{tpu_custom_call.1} parent=1 // loop_footer_branch
      %23 = sbr.rel target = $region3
    $region8: #{tpu_custom_call.1} parent=1 // loop_exit
      _
    %959 = vsyncpa [#allocation4], 1
    %s960 = scalar_lea.sflag [#allocation4], 1
    %961 = vsyncpa %s960, 1
    %962 = vsyncpa [#allocation7], 1
    %963 = vsyncpa [#allocation5], 1
    %s964 = scalar_lea.sflag [#allocation5], 1
    %965 = vsyncpa %s964, 1
    %966 = vsyncpa [#allocation11], 1
    %s967 = scalar_lea.sflag [#allocation11], 1
    %968 = vsyncpa %s967, 1

</llo_original>
